<compile_context>
chip_gen: v6e
topology: v6e:2x2x1
jax: 0.10.0
libtpu: 0.0.40
codegen_flags: <defaults>
</compile_context>

<pallas_src>
import functools

import numpy as np

import jax
import jax.numpy as jnp
from jax.experimental import pallas as pl
from jax.experimental.pallas import tpu as pltpu


def _residual_cnn_kernel(x_ref, w1_ref, b1_ref, w2_ref, b2_ref, o_ref,
                         pad_ref, *, H, K, P, PAD_TOP):
    """One grid step = G images packed side-by-side along the lane axis.

    x_ref  : (1, H, LW)   f32   lane-dense input rows (LW = G*W*C)
    w1_ref : (K*LW, LW)   bf16  lowered conv1 weights: K stacked row-matmul
                                matrices (block-diagonal over the G images,
                                horizontal taps + SAME clamping folded in)
    b1_ref : (1, LW)      f32   conv1 bias pre-tiled over (G, W)
    w2_ref : (K*LW, LW)   bf16  lowered conv2 weights
    b2_ref : (1, LW)      f32   conv2 bias pre-tiled
    o_ref  : (1, H, LW)   f32   lane-dense output rows
    pad_ref: (PAD_TOP+H+P, LW) bf16  vertically padded activations (scratch)
    """
    LW = x_ref.shape[2]

    x = x_ref[0]                      # (H, LW) residual source (pre-ReLU input)
    b1 = b1_ref[...]                  # (1, LW)
    b2 = b2_ref[...]

    # ---- relu + dropout (identity at inference) -----------------------------
    # TODO(synk): training-mode dropout would use pltpu.prng_seed/prng_random_bits.
    a = jnp.maximum(x, 0.0)

    # ---- zero the P halo rows above/below the interior ----------------------
    # Done every step (not @pl.when(program_id == 0)): with a megacore-split
    # parallel grid each core has its own scratch and may never run iteration 0.
    # Cost is two (P, LW) stores.
    zrow = jnp.zeros((P, LW), pad_ref.dtype)
    pad_ref[PAD_TOP - P:PAD_TOP, :] = zrow
    pad_ref[PAD_TOP + H:PAD_TOP + H + P, :] = zrow

    def conv(act_f32, w_ref, bias):
        # Single aligned, full-lane-width interior store (bf16; start row is a
        # multiple of the 16-row bf16 sublane tile, 128 lanes wide -> unmasked).
        pad_ref[PAD_TOP:PAD_TOP + H, :] = act_f32.astype(pad_ref.dtype)
        # K accumulated MXU dots over row-shifted views of pad_ref (no im2col
        # scratch round-trip).  Contraction = LW = 128 -> one MXU pass per dot;
        # bf16 inputs, f32 accumulation.
        acc = jnp.broadcast_to(bias, (H, LW))
        for kh in range(K):
            r0 = PAD_TOP - P + kh
            w_k = w_ref[kh * LW:(kh + 1) * LW, :]
            acc = acc + jnp.dot(pad_ref[r0:r0 + H, :], w_k,
                                preferred_element_type=jnp.float32)
        return acc

    y = jnp.maximum(conv(a, w1_ref, b1), 0.0)      # conv1 + relu   (f32)
    z = conv(y, w2_ref, b2)                         # conv2          (f32)

    # ---- residual add (pre-ReLU input), lane-dense unmasked store -----------
    o_ref[0] = (z + x).astype(o_ref.dtype)


def _lower_conv_weight(w_hwio, W, group):
    """Lower HWIO conv weights (stride 1, SAME padding) into K row-matmul
    matrices of shape (group*W*C, group*W*C), block-diagonal over the `group`
    images packed along the lane axis.  Horizontal (kw) taps AND the SAME
    boundary clamping are folded into the matrix, so the kernel only needs
    vertical zero-padding:

      M[kh, g*W*Cin + (w+kw-P)*Cin + ci, g*W*Cout + w*Cout + co]
          = w_hwio[kh, kw, ci, co]        (only where 0 <= w+kw-P < W)
    """
    K, _, Cin, Cout = w_hwio.shape
    P = K // 2
    w = np.asarray(w_hwio, dtype=np.float32)
    m = np.zeros((K, W * Cin, W * Cout), np.float32)
    for kw in range(K):
        for ow in range(W):
            sw = ow + kw - P
            if 0 <= sw < W:
                m[:, sw * Cin:(sw + 1) * Cin, ow * Cout:(ow + 1) * Cout] = w[:, kw]
    lw_in, lw_out = group * W * Cin, group * W * Cout
    mg = np.zeros((K, lw_in, lw_out), np.float32)
    for g in range(group):
        mg[:, g * W * Cin:(g + 1) * W * Cin,
           g * W * Cout:(g + 1) * W * Cout] = m
    return jnp.asarray(mg.reshape(K * lw_in, lw_out), dtype=jnp.bfloat16)


def residual_cnn_forward(x_nchw, w1, b1, w2, b2, *, images_per_step=None):
    """x_nchw: (B, C, H, W); w1/w2 HWIO (K, K, Cin, Cout); returns (B, C, H, W)."""
    B, Cin, H, W = x_nchw.shape
    K, _, cin_w, Cout = w1.shape
    assert cin_w == Cin, "weight Cin mismatch"
    assert Cin == Cout, "residual add requires in_channels == out_channels"
    assert K % 2 == 1, "padding = K // 2 keeps the size (needed for residual) only for odd K"
    P = K // 2
    C = Cout
    WC = W * C

    if images_per_step is None:
        # Pack 2 images along the lane axis (W*C = 64 -> LW = 128: unmasked
        # full-lane stores) while keeping >= 2 "parallel" grid steps so v7x's
        # two TensorCores both get work.  On single-TC parts (v5e/v6e) with
        # tiny batches, pass images_per_step=B to fold everything into one
        # grid step and amortize the constant-weight fetch / per-step overhead.
        images_per_step = 2 if B % 2 == 0 else 1
    G = images_per_step
    assert B % G == 0, "batch must be divisible by images_per_step"
    LW = G * WC
    # bf16 scratch: align the interior store to the 16-row bf16 sublane tile.
    PAD_TOP = ((P + 15) // 16) * 16

    # ---- lane-dense activation layout: (B//G, H, G*W*C) ---------------------
    x_nhwc = jnp.transpose(x_nchw, (0, 2, 3, 1)).astype(jnp.float32)
    xs = (x_nhwc.reshape(B // G, G, H, WC)
                .transpose(0, 2, 1, 3)
                .reshape(B // G, H, LW))

    # ---- lowered bf16 weights / pre-tiled f32 biases (host-side, once) ------
    w1_flat = _lower_conv_weight(w1, W, G)          # (K*LW, LW) bf16
    w2_flat = _lower_conv_weight(w2, W, G)
    b1_row = jnp.tile(b1.astype(jnp.float32), (G * W,)).reshape(1, LW)
    b2_row = jnp.tile(b2.astype(jnp.float32), (G * W,)).reshape(1, LW)

    kernel = functools.partial(_residual_cnn_kernel, H=H, K=K, P=P,
                               PAD_TOP=PAD_TOP)

    out_s = pl.pallas_call(
        kernel,
        out_shape=jax.ShapeDtypeStruct((B // G, H, LW), jnp.float32),
        grid_spec=pltpu.PrefetchScalarGridSpec(
            num_scalar_prefetch=0,
            grid=(B // G,),
            in_specs=[
                pl.BlockSpec((1, H, LW), lambda i: (i, 0, 0)),
                pl.BlockSpec((K * LW, LW), lambda i: (0, 0)),   # constant index
                pl.BlockSpec((1, LW), lambda i: (0, 0)),        #  -> DMA'd once
                pl.BlockSpec((K * LW, LW), lambda i: (0, 0)),
                pl.BlockSpec((1, LW), lambda i: (0, 0)),
            ],
            out_specs=pl.BlockSpec((1, H, LW), lambda i: (i, 0, 0)),
            scratch_shapes=[
                pltpu.VMEM((PAD_TOP + H + P, LW), jnp.bfloat16),  # padded rows
            ],
        ),
        compiler_params=pltpu.CompilerParams(
            dimension_semantics=("parallel",)),
    )(xs, w1_flat, b1_row, w2_flat, b2_row)

    # ---- undo the lane packing: (B//G, H, G*W*C) -> NCHW ---------------------
    out_nhwc = (out_s.reshape(B // G, H, G, W, C)
                     .transpose(0, 2, 1, 3, 4)
                     .reshape(B, H, W, C))
    return jnp.transpose(out_nhwc, (0, 3, 1, 2)).astype(x_nchw.dtype)


def _reference_forward(x_nchw, w1, b1, w2, b2):
    """Pure-JAX f32 reference (same NHWC/HWIO conventions) for verification."""
    x = jnp.transpose(x_nchw, (0, 2, 3, 1)).astype(jnp.float32)
    residual = x
    a = jax.nn.relu(x)
    dn = ("NHWC", "HWIO", "NHWC")
    y = jax.lax.conv_general_dilated(a, w1, window_strides=(1, 1),
                                     padding="SAME", dimension_numbers=dn) + b1
    y = jax.nn.relu(y)
    y = jax.lax.conv_general_dilated(y, w2, window_strides=(1, 1),
                                     padding="SAME", dimension_numbers=dn) + b2
    y = y + residual
    return jnp.transpose(y, (0, 3, 1, 2))


if __name__ == "__main__":
    # ResidualCNN(in_channels=4, out_channels=4, kernel=3, stride=1, dropout=0.1)
    # B=4 so that with 2 images per grid step the batch axis still has 2
    # "parallel" steps (keeps both v7x TensorCores busy).
    B, C, H, W, K = 4, 4, 16, 16, 3

    key = jax.random.PRNGKey(0)
    kx, kw1, kb1, kw2, kb2 = jax.random.split(key, 5)

    x = jax.random.normal(kx, (B, C, H, W), dtype=jnp.float32)

    # Deterministic parameter init (PyTorch-like uniform fan-in bound), HWIO layout.
    fan_in = C * K * K
    bound = 1.0 / (fan_in ** 0.5)
    w1 = jax.random.uniform(kw1, (K, K, C, C), jnp.float32, -bound, bound)
    b1 = jax.random.uniform(kb1, (C,), jnp.float32, -bound, bound)
    w2 = jax.random.uniform(kw2, (K, K, C, C), jnp.float32, -bound, bound)
    b2 = jax.random.uniform(kb2, (C,), jnp.float32, -bound, bound)

    out = jax.block_until_ready(residual_cnn_forward(x, w1, b1, w2, b2))
    ref = jax.block_until_ready(_reference_forward(x, w1, b1, w2, b2))

    assert out.shape == (B, C, H, W)
    # bf16 MXU inputs (weights + padded activations) with f32 accumulation:
    # relaxed tolerance vs. the f32 reference.
    assert jnp.allclose(out, ref, atol=3e-2, rtol=3e-2), "mismatch vs reference"

    print("KERNEL_OK")
</pallas_src>

<mosaic_0001>
module attributes {stable_mosaic.version = 11 : i64} {
  func.func @_residual_cnn_kernel(%arg0: i32, %arg1: memref<1x16x128xf32, #tpu.memory_space<vmem>>, %arg2: memref<384x128xbf16, #tpu.memory_space<vmem>>, %arg3: memref<1x128xf32, #tpu.memory_space<vmem>>, %arg4: memref<384x128xbf16, #tpu.memory_space<vmem>>, %arg5: memref<1x128xf32, #tpu.memory_space<vmem>>, %arg6: memref<1x16x128xf32, #tpu.memory_space<vmem>>, %arg7: memref<33x128xbf16, #tpu.memory_space<vmem>>) attributes {dimension_semantics = [#tpu.dimension_semantics<parallel>], iteration_bounds = array<i64: 2>, scalar_prefetch = 0 : i64, scratch_operands = 1 : i64, tpu.core_type = #tpu.core_type<tc>, window_params = [{transform_indices = @transform_0, window_bounds = array<i64: 1, 16, 128>}, {pipeline_mode = #tpu.pipeline_mode<synchronous>, transform_indices = @transform_1, window_bounds = array<i64: 384, 128>}, {pipeline_mode = #tpu.pipeline_mode<synchronous>, transform_indices = @transform_2, window_bounds = array<i64: 1, 128>}, {pipeline_mode = #tpu.pipeline_mode<synchronous>, transform_indices = @transform_3, window_bounds = array<i64: 384, 128>}, {pipeline_mode = #tpu.pipeline_mode<synchronous>, transform_indices = @transform_4, window_bounds = array<i64: 1, 128>}, {transform_indices = @transform_5, window_bounds = array<i64: 1, 16, 128>}]} {
    %c0 = arith.constant 0 : index
    %c0_0 = arith.constant 0 : index
    %c0_1 = arith.constant 0 : index
    %0 = vector.load %arg1[%c0, %c0_0, %c0_1] : memref<1x16x128xf32, #tpu.memory_space<vmem>>, vector<1x16x128xf32>
    %1 = vector.shape_cast %0 : vector<1x16x128xf32> to vector<16x128xf32>
    %c0_2 = arith.constant 0 : index
    %c0_3 = arith.constant 0 : index
    %2 = vector.load %arg3[%c0_2, %c0_3] : memref<1x128xf32, #tpu.memory_space<vmem>>, vector<1x128xf32>
    %c0_4 = arith.constant 0 : index
    %c0_5 = arith.constant 0 : index
    %3 = vector.load %arg5[%c0_4, %c0_5] : memref<1x128xf32, #tpu.memory_space<vmem>>, vector<1x128xf32>
    %cst = arith.constant 0.000000e+00 : f32
    %4 = vector.broadcast %cst : f32 to vector<16x128xf32>
    %5 = arith.maximumf %1, %4 : vector<16x128xf32>
    %cst_6 = arith.constant 0.000000e+00 : bf16
    %6 = vector.broadcast %cst_6 : bf16 to vector<1x128xbf16>
    %c15 = arith.constant 15 : index
    %c0_7 = arith.constant 0 : index
    %7 = vector.load %arg7[%c15, %c0_7] : memref<33x128xbf16, #tpu.memory_space<vmem>>, vector<1x128xbf16>
    tpu.vector_store %arg7[%c15, %c0_7], %6 {strides = array<i32>} : memref<33x128xbf16, #tpu.memory_space<vmem>>, vector<1x128xbf16>,
    %c32 = arith.constant 32 : index
    %c0_8 = arith.constant 0 : index
    %8 = vector.load %arg7[%c32, %c0_8] : memref<33x128xbf16, #tpu.memory_space<vmem>>, vector<1x128xbf16>
    tpu.vector_store %arg7[%c32, %c0_8], %6 {strides = array<i32>} : memref<33x128xbf16, #tpu.memory_space<vmem>>, vector<1x128xbf16>,
    %9 = arith.truncf %5 : vector<16x128xf32> to vector<16x128xbf16>
    %c16 = arith.constant 16 : index
    %c0_9 = arith.constant 0 : index
    %10 = vector.load %arg7[%c16, %c0_9] : memref<33x128xbf16, #tpu.memory_space<vmem>>, vector<16x128xbf16>
    tpu.vector_store %arg7[%c16, %c0_9], %9 {strides = array<i32>} : memref<33x128xbf16, #tpu.memory_space<vmem>>, vector<16x128xbf16>,
    %11 = vector.shape_cast %2 : vector<1x128xf32> to vector<1x128xf32>
    %12 = vector.broadcast %11 : vector<1x128xf32> to vector<16x128xf32>
    %c0_10 = arith.constant 0 : index
    %c0_11 = arith.constant 0 : index
    %13 = vector.load %arg2[%c0_10, %c0_11] : memref<384x128xbf16, #tpu.memory_space<vmem>>, vector<128x128xbf16>
    %c15_12 = arith.constant 15 : index
    %c0_13 = arith.constant 0 : index
    %14 = vector.load %arg7[%c15_12, %c0_13] : memref<33x128xbf16, #tpu.memory_space<vmem>>, vector<16x128xbf16>
    %cst_14 = arith.constant dense<0.000000e+00> : vector<16x128xf32>
    %15 = tpu.matmul %14, %13, %cst_14 {dimension_numbers = #tpu.dot_dimension_numbers<[1], [0], [0], [1], [0, 0, 1, 1], [], []>} : vector<16x128xbf16>, vector<128x128xbf16>, vector<16x128xf32> -> vector<16x128xf32>
    %16 = arith.addf %12, %15 : vector<16x128xf32>
    %c128 = arith.constant 128 : index
    %c0_15 = arith.constant 0 : index
    %17 = vector.load %arg2[%c128, %c0_15] : memref<384x128xbf16, #tpu.memory_space<vmem>>, vector<128x128xbf16>
    %c16_16 = arith.constant 16 : index
    %c0_17 = arith.constant 0 : index
    %18 = vector.load %arg7[%c16_16, %c0_17] : memref<33x128xbf16, #tpu.memory_space<vmem>>, vector<16x128xbf16>
    %cst_18 = arith.constant dense<0.000000e+00> : vector<16x128xf32>
    %19 = tpu.matmul %18, %17, %cst_18 {dimension_numbers = #tpu.dot_dimension_numbers<[1], [0], [0], [1], [0, 0, 1, 1], [], []>} : vector<16x128xbf16>, vector<128x128xbf16>, vector<16x128xf32> -> vector<16x128xf32>
    %20 = arith.addf %16, %19 : vector<16x128xf32>
    %c256 = arith.constant 256 : index
    %c0_19 = arith.constant 0 : index
    %21 = vector.load %arg2[%c256, %c0_19] : memref<384x128xbf16, #tpu.memory_space<vmem>>, vector<128x128xbf16>
    %c17 = arith.constant 17 : index
    %c0_20 = arith.constant 0 : index
    %22 = vector.load %arg7[%c17, %c0_20] : memref<33x128xbf16, #tpu.memory_space<vmem>>, vector<16x128xbf16>
    %cst_21 = arith.constant dense<0.000000e+00> : vector<16x128xf32>
    %23 = tpu.matmul %22, %21, %cst_21 {dimension_numbers = #tpu.dot_dimension_numbers<[1], [0], [0], [1], [0, 0, 1, 1], [], []>} : vector<16x128xbf16>, vector<128x128xbf16>, vector<16x128xf32> -> vector<16x128xf32>
    %24 = arith.addf %20, %23 : vector<16x128xf32>
    %cst_22 = arith.constant 0.000000e+00 : f32
    %25 = vector.broadcast %cst_22 : f32 to vector<16x128xf32>
    %26 = arith.maximumf %24, %25 : vector<16x128xf32>
    %27 = arith.truncf %26 : vector<16x128xf32> to vector<16x128xbf16>
    %c16_23 = arith.constant 16 : index
    %c0_24 = arith.constant 0 : index
    %28 = vector.load %arg7[%c16_23, %c0_24] : memref<33x128xbf16, #tpu.memory_space<vmem>>, vector<16x128xbf16>
    tpu.vector_store %arg7[%c16_23, %c0_24], %27 {strides = array<i32>} : memref<33x128xbf16, #tpu.memory_space<vmem>>, vector<16x128xbf16>,
    %29 = vector.shape_cast %3 : vector<1x128xf32> to vector<1x128xf32>
    %30 = vector.broadcast %29 : vector<1x128xf32> to vector<16x128xf32>
    %c0_25 = arith.constant 0 : index
    %c0_26 = arith.constant 0 : index
    %31 = vector.load %arg4[%c0_25, %c0_26] : memref<384x128xbf16, #tpu.memory_space<vmem>>, vector<128x128xbf16>
    %c15_27 = arith.constant 15 : index
    %c0_28 = arith.constant 0 : index
    %32 = vector.load %arg7[%c15_27, %c0_28] : memref<33x128xbf16, #tpu.memory_space<vmem>>, vector<16x128xbf16>
    %cst_29 = arith.constant dense<0.000000e+00> : vector<16x128xf32>
    %33 = tpu.matmul %32, %31, %cst_29 {dimension_numbers = #tpu.dot_dimension_numbers<[1], [0], [0], [1], [0, 0, 1, 1], [], []>} : vector<16x128xbf16>, vector<128x128xbf16>, vector<16x128xf32> -> vector<16x128xf32>
    %34 = arith.addf %30, %33 : vector<16x128xf32>
    %c128_30 = arith.constant 128 : index
    %c0_31 = arith.constant 0 : index
    %35 = vector.load %arg4[%c128_30, %c0_31] : memref<384x128xbf16, #tpu.memory_space<vmem>>, vector<128x128xbf16>
    %c16_32 = arith.constant 16 : index
    %c0_33 = arith.constant 0 : index
    %36 = vector.load %arg7[%c16_32, %c0_33] : memref<33x128xbf16, #tpu.memory_space<vmem>>, vector<16x128xbf16>
    %cst_34 = arith.constant dense<0.000000e+00> : vector<16x128xf32>
    %37 = tpu.matmul %36, %35, %cst_34 {dimension_numbers = #tpu.dot_dimension_numbers<[1], [0], [0], [1], [0, 0, 1, 1], [], []>} : vector<16x128xbf16>, vector<128x128xbf16>, vector<16x128xf32> -> vector<16x128xf32>
    %38 = arith.addf %34, %37 : vector<16x128xf32>
    %c256_35 = arith.constant 256 : index
    %c0_36 = arith.constant 0 : index
    %39 = vector.load %arg4[%c256_35, %c0_36] : memref<384x128xbf16, #tpu.memory_space<vmem>>, vector<128x128xbf16>
    %c17_37 = arith.constant 17 : index
    %c0_38 = arith.constant 0 : index
    %40 = vector.load %arg7[%c17_37, %c0_38] : memref<33x128xbf16, #tpu.memory_space<vmem>>, vector<16x128xbf16>
    %cst_39 = arith.constant dense<0.000000e+00> : vector<16x128xf32>
    %41 = tpu.matmul %40, %39, %cst_39 {dimension_numbers = #tpu.dot_dimension_numbers<[1], [0], [0], [1], [0, 0, 1, 1], [], []>} : vector<16x128xbf16>, vector<128x128xbf16>, vector<16x128xf32> -> vector<16x128xf32>
    %42 = arith.addf %38, %41 : vector<16x128xf32>
    %43 = arith.addf %42, %1 : vector<16x128xf32>
    %c0_40 = arith.constant 0 : index
    %c0_41 = arith.constant 0 : index
    %c0_42 = arith.constant 0 : index
    %44 = vector.load %arg6[%c0_40, %c0_41, %c0_42] : memref<1x16x128xf32, #tpu.memory_space<vmem>>, vector<1x16x128xf32>
    %45 = vector.shape_cast %44 : vector<1x16x128xf32> to vector<16x128xf32>
    %46 = vector.shape_cast %43 : vector<16x128xf32> to vector<1x16x128xf32>
    tpu.vector_store %arg6[%c0_40, %c0_41, %c0_42], %46 {strides = array<i32>} : memref<1x16x128xf32, #tpu.memory_space<vmem>>, vector<1x16x128xf32>,
    return
  }
  func.func @transform_0(%arg0: i32) -> (i32, i32, i32) {
    %c0_i32 = arith.constant 0 : i32
    %c0_i32_0 = arith.constant 0 : i32
    %c0_i32_1 = arith.constant 0 : i32
    return %arg0, %c0_i32, %c0_i32_0 : i32, i32, i32
  }
  func.func @transform_1(%arg0: i32) -> (i32, i32) {
    %c0_i32 = arith.constant 0 : i32
    %c0_i32_0 = arith.constant 0 : i32
    %c0_i32_1 = arith.constant 0 : i32
    return %c0_i32, %c0_i32_0 : i32, i32
  }
  func.func @transform_2(%arg0: i32) -> (i32, i32) {
    %c0_i32 = arith.constant 0 : i32
    %c0_i32_0 = arith.constant 0 : i32
    %c0_i32_1 = arith.constant 0 : i32
    return %c0_i32, %c0_i32_0 : i32, i32
  }
  func.func @transform_3(%arg0: i32) -> (i32, i32) {
    %c0_i32 = arith.constant 0 : i32
    %c0_i32_0 = arith.constant 0 : i32
    %c0_i32_1 = arith.constant 0 : i32
    return %c0_i32, %c0_i32_0 : i32, i32
  }
  func.func @transform_4(%arg0: i32) -> (i32, i32) {
    %c0_i32 = arith.constant 0 : i32
    %c0_i32_0 = arith.constant 0 : i32
    %c0_i32_1 = arith.constant 0 : i32
    return %c0_i32, %c0_i32_0 : i32, i32
  }
  func.func @transform_5(%arg0: i32) -> (i32, i32, i32) {
    %c0_i32 = arith.constant 0 : i32
    %c0_i32_0 = arith.constant 0 : i32
    %c0_i32_1 = arith.constant 0 : i32
    return %arg0, %c0_i32, %c0_i32_0 : i32, i32, i32
  }
}

</mosaic_0001>

<llo_original>
// kernel: tpu_custom_call.1
$region0: #{tpu_custom_call.1}
  #allocation0 [shape = 'u32[]', space=smem, size = 0x4, offset = 0x4, fixed_abs, tag = 'smem constant byte address 0x4 - core index']
  #allocation1 [shape = 'u32[144,128]{1,0:T(1,128)}', space=vmem, size = 0x12000, scoped, tag = 'internal scratch']
  #allocation2 [shape = 'bf16[33,128]{1,0:T(8,128)(2,1)}', space=vmem, size = 0x2800, scoped, tag = 'scratch operand']
  %s0 = inlined_call_operand.hbm [shape: f32[2,16,128], index: 0, kind: input, shape index: {}]
  %s1 = inlined_call_operand.hbm [shape: bf16[384,128], index: 1, kind: input, shape index: {}]
  %s2 = inlined_call_operand.vmem [shape: f32[1,128], index: 2, kind: input, shape index: {}]
  %s3 = inlined_call_operand.hbm [shape: bf16[384,128], index: 3, kind: input, shape index: {}]
  %s4 = inlined_call_operand.vmem [shape: f32[1,128], index: 4, kind: input, shape index: {}]
  %s5 = inlined_call_operand.hbm [shape: f32[2,16,128], index: 5, kind: output, shape index: {}]
  %s6 = sld [smem:[#allocation0]]
  $region65: #{tpu_custom_call.1} parent=0
    _
  %s8 = ssub.s32 1, %s6
  %s9 = scalar_select 0, %s8, %s6
  $region1: #{tpu_custom_call.1} parent=0
    #allocation3 [shape = 'u8[16384]{0}', space=vmem, size = 0x4000, scoped, tag = 'input window, operand 0']
    #allocation4 [shape = 's32[2]{0}', space=sflag, size = 0x8, scoped, tag = 'scoped memory for tpu_custom_call.1']
    #allocation5 [shape = 's32[2]{0}', space=sflag, size = 0x8, scoped, tag = 'scoped memory for tpu_custom_call.1']
    #allocation6 [shape = 'u8[98304]{0}', space=vmem, size = 0x18000, scoped, tag = 'input window, operand 1, single buffered']
    #allocation7 [shape = 's32[1]{0}', space=sflag, size = 0x4, scoped, tag = 'scoped memory for tpu_custom_call.1']
    #allocation8 [shape = 'u8[98304]{0}', space=vmem, size = 0x18000, scoped, tag = 'input window, operand 3, single buffered']
    #allocation9 [shape = 'u8[16384]{0}', space=vmem, size = 0x4000, scoped, tag = 'output window, operand 0']
    %10 = vsyncpa [#allocation4], 0
    %s11 = scalar_lea.sflag [#allocation4], 1
    %12 = vsyncpa %s11, 0
    %13 = vsyncpa [#allocation7], 0
    %14 = vsyncpa [#allocation5], 0
    %s15 = scalar_lea.sflag [#allocation5], 1
    %16 = vsyncpa %s15, 0
    loop: start=0, step=1, limit=4
    $region2: #{tpu_custom_call.1} parent=1 // loop_pre_header
      _
    $region3: #{tpu_custom_call.1} parent=1 // loop_header
      %s18 = sphi 0, %s22
      %p19 = scmp.ge.s32.totalorder %s18, 4
      %s28 = sphi 0, %s30
      %s31 = sphi 0, %s28
      %s32 = sphi 0, %s31
      %s48 = sphi 0, %s32
      %s52 = sphi 0, %s52
      %s54 = sphi 0, %s52
      %s55 = sphi 0, %s54
      %s69 = sphi 0, %s55
      %s73 = sphi 0, %s73
      %s75 = sphi 0, %s73
      %s76 = sphi 0, %s75
      %s90 = sphi 0, %s76
      %s94 = sphi 0, %s94
      %s96 = sphi 0, %s94
      %s97 = sphi 0, %s96
      %s111 = sphi 0, %s97
      %s115 = sphi 0, %s115
      %s117 = sphi 0, %s115
      %s118 = sphi 0, %s117
      %s132 = sphi 0, %s118
      %s138 = sphi 0, %s140
      %s141 = sphi 0, %s138
      %s142 = sphi 0, %s141
      %s158 = sphi 0, %s142
    $region4: #{tpu_custom_call.1} parent=1 // loop_header_branch
      %21 = sbr.rel (%p19) target = $region8
    $region5: #{tpu_custom_call.1} parent=1 // loop_body
      %s23 = ssub.s32 %s18, 1
      %s24 = ssub.s32 %s18, 2
      %s25 = sadd.s32 %s18, 1
      %s26 = ssub.s32 %s18, %s25
      %p27 = scmp.eq.s32.totalorder %s26, 0
      %s29 = sadd.s32 %s28, 1
      %s30 = scalar_select %p27, %s28, %s29
      %p33 = pneg %p27
      %p34 = scmp.eq.s32.totalorder %s18, 1
      %p35 = por %p33, %p34
      %p36 = scmp.ne.s32.totalorder %s28, %s31
      %p37 = scmp.eq.s32.totalorder %s18, 0
      %p38 = por %p36, %p37
      %p39 = scmp.ne.s32.totalorder %s28, %s31
      %p40 = scmp.eq.s32.totalorder %s23, 1
      %p41 = por %p39, %p40
      %p42 = scmp.ne.s32.totalorder %s31, %s32
      %p43 = scmp.eq.s32.totalorder %s23, 0
      %p44 = por %p42, %p43
      %p45 = scmp.ne.s32.totalorder %s31, %s32
      %p46 = scmp.eq.s32.totalorder %s24, 1
      %p47 = por %p45, %p46
      %p49 = scmp.ne.s32.totalorder %s32, %s48
      %p50 = scmp.eq.s32.totalorder %s24, 0
      %p51 = por %p49, %p50
      %s53 = sadd.s32 %s52, 1
      %p56 = scmp.eq.s32.totalorder %s18, 1
      %p57 = scmp.ne.s32.totalorder %s52, %s54
      %p58 = scmp.eq.s32.totalorder %s18, 0
      %p59 = por %p57, %p58
      %p60 = scmp.ne.s32.totalorder %s52, %s54
      %p61 = scmp.eq.s32.totalorder %s23, 1
      %p62 = por %p60, %p61
      %p63 = scmp.ne.s32.totalorder %s54, %s55
      %p64 = scmp.eq.s32.totalorder %s23, 0
      %p65 = por %p63, %p64
      %p66 = scmp.ne.s32.totalorder %s54, %s55
      %p67 = scmp.eq.s32.totalorder %s24, 1
      %p68 = por %p66, %p67
      %p70 = scmp.ne.s32.totalorder %s55, %s69
      %p71 = scmp.eq.s32.totalorder %s24, 0
      %p72 = por %p70, %p71
      %s74 = sadd.s32 %s73, 1
      %p77 = scmp.eq.s32.totalorder %s18, 1
      %p78 = scmp.ne.s32.totalorder %s73, %s75
      %p79 = scmp.eq.s32.totalorder %s18, 0
      %p80 = por %p78, %p79
      %p81 = scmp.ne.s32.totalorder %s73, %s75
      %p82 = scmp.eq.s32.totalorder %s23, 1
      %p83 = por %p81, %p82
      %p84 = scmp.ne.s32.totalorder %s75, %s76
      %p85 = scmp.eq.s32.totalorder %s23, 0
      %p86 = por %p84, %p85
      %p87 = scmp.ne.s32.totalorder %s75, %s76
      %p88 = scmp.eq.s32.totalorder %s24, 1
      %p89 = por %p87, %p88
      %p91 = scmp.ne.s32.totalorder %s76, %s90
      %p92 = scmp.eq.s32.totalorder %s24, 0
      %p93 = por %p91, %p92
      %s95 = sadd.s32 %s94, 1
      %p98 = scmp.eq.s32.totalorder %s18, 1
      %p99 = scmp.ne.s32.totalorder %s94, %s96
      %p100 = scmp.eq.s32.totalorder %s18, 0
      %p101 = por %p99, %p100
      %p102 = scmp.ne.s32.totalorder %s94, %s96
      %p103 = scmp.eq.s32.totalorder %s23, 1
      %p104 = por %p102, %p103
      %p105 = scmp.ne.s32.totalorder %s96, %s97
      %p106 = scmp.eq.s32.totalorder %s23, 0
      %p107 = por %p105, %p106
      %p108 = scmp.ne.s32.totalorder %s96, %s97
      %p109 = scmp.eq.s32.totalorder %s24, 1
      %p110 = por %p108, %p109
      %p112 = scmp.ne.s32.totalorder %s97, %s111
      %p113 = scmp.eq.s32.totalorder %s24, 0
      %p114 = por %p112, %p113
      %s116 = sadd.s32 %s115, 1
      %p119 = scmp.eq.s32.totalorder %s18, 1
      %p120 = scmp.ne.s32.totalorder %s115, %s117
      %p121 = scmp.eq.s32.totalorder %s18, 0
      %p122 = por %p120, %p121
      %p123 = scmp.ne.s32.totalorder %s115, %s117
      %p124 = scmp.eq.s32.totalorder %s23, 1
      %p125 = por %p123, %p124
      %p126 = scmp.ne.s32.totalorder %s117, %s118
      %p127 = scmp.eq.s32.totalorder %s23, 0
      %p128 = por %p126, %p127
      %p129 = scmp.ne.s32.totalorder %s117, %s118
      %p130 = scmp.eq.s32.totalorder %s24, 1
      %p131 = por %p129, %p130
      %p133 = scmp.ne.s32.totalorder %s118, %s132
      %p134 = scmp.eq.s32.totalorder %s24, 0
      %p135 = por %p133, %p134
      %s136 = ssub.s32 %s18, %s25
      %p137 = scmp.eq.s32.totalorder %s136, 0
      %s139 = sadd.s32 %s138, 1
      %s140 = scalar_select %p137, %s138, %s139
      %p143 = pneg %p137
      %p144 = scmp.eq.s32.totalorder %s18, 1
      %p145 = por %p143, %p144
      %p146 = scmp.ne.s32.totalorder %s138, %s141
      %p147 = scmp.eq.s32.totalorder %s18, 0
      %p148 = por %p146, %p147
      %p149 = scmp.ne.s32.totalorder %s138, %s141
      %p150 = scmp.eq.s32.totalorder %s23, 1
      %p151 = por %p149, %p150
      %p152 = scmp.ne.s32.totalorder %s141, %s142
      %p153 = scmp.eq.s32.totalorder %s23, 0
      %p154 = por %p152, %p153
      %p155 = scmp.ne.s32.totalorder %s141, %s142
      %p156 = scmp.eq.s32.totalorder %s24, 1
      %p157 = por %p155, %p156
      %p159 = scmp.ne.s32.totalorder %s142, %s158
      %p160 = scmp.eq.s32.totalorder %s24, 0
      %p161 = por %p159, %p160
      %p162 = scmp.le.s32.totalorder 1, %s18
      %p163 = scmp.lt.s32.totalorder %s18, 3
      %p164 = pnand %p162, %p163
      %p165 = pneg %p164
      // Predicated region
      $region9: #{tpu_custom_call.1} parent=5 // pred_check
        _
      $region10: #{tpu_custom_call.1} parent=5 // pred_check_branch
        %167 = sbr.rel (%p164) target = $region12
      $region11: #{tpu_custom_call.1} parent=5 // pred_region
        %s168 = ssub.s32 %s18, 1
        // Predicated region
        $region13: #{tpu_custom_call.1} parent=11 // pred_check
          %p169 = pneg %p65
        $region14: #{tpu_custom_call.1} parent=11 // pred_check_branch
          %171 = sbr.rel (%p169) target = $region16
        $region15: #{tpu_custom_call.1} parent=11 // pred_region
          %s173 = ssub.s32 3072, 3072
          %174 = vsyncadd [#allocation7], %s173
          %s175 = sshll.u32 [#allocation6], 4
          %s176 = int_to_ptr.vmem [resolvable:$true] %s175
          %181 = dma.hbm_to_vmem [thread:$0]  %s1, 3072, %s176, [#allocation7], 64, 64, 4
        $region16: #{tpu_custom_call.1} parent=11 // pred_fallthru
          _
        // Predicated region
        $region17: #{tpu_custom_call.1} parent=11 // pred_check
          %p182 = pneg %p86
        $region18: #{tpu_custom_call.1} parent=11 // pred_check_branch
          %184 = sbr.rel (%p182) target = $region20
        $region19: #{tpu_custom_call.1} parent=11 // pred_region
          _
        $region20: #{tpu_custom_call.1} parent=11 // pred_fallthru
          _
        // Predicated region
        $region21: #{tpu_custom_call.1} parent=11 // pred_check
          %p185 = pneg %p107
        $region22: #{tpu_custom_call.1} parent=11 // pred_check_branch
          %187 = sbr.rel (%p185) target = $region24
        $region23: #{tpu_custom_call.1} parent=11 // pred_region
          %s189 = ssub.s32 3072, 3072
          %190 = vsyncadd [#allocation7], %s189
          %s191 = sshll.u32 [#allocation8], 4
          %s192 = int_to_ptr.vmem [resolvable:$true] %s191
          %197 = dma.hbm_to_vmem [thread:$0]  %s3, 3072, %s192, [#allocation7], 64, 64, 4
        $region24: #{tpu_custom_call.1} parent=11 // pred_fallthru
          _
        // Predicated region
        $region25: #{tpu_custom_call.1} parent=11 // pred_check
          %p198 = pneg %p128
        $region26: #{tpu_custom_call.1} parent=11 // pred_check_branch
          %200 = sbr.rel (%p198) target = $region28
        $region27: #{tpu_custom_call.1} parent=11 // pred_region
          _
        $region28: #{tpu_custom_call.1} parent=11 // pred_fallthru
          _
      $region12: #{tpu_custom_call.1} parent=5 // pred_fallthru
        _
      %p201 = scmp.lt.s32.totalorder %s18, 2
      // Predicated region
      $region29: #{tpu_custom_call.1} parent=5 // pred_check
        %p202 = pneg %p201
      $region30: #{tpu_custom_call.1} parent=5 // pred_check_branch
        %204 = sbr.rel (%p202) target = $region32
      $region31: #{tpu_custom_call.1} parent=5 // pred_region
        // Predicated region
        $region33: #{tpu_custom_call.1} parent=31 // pred_check
          %p205 = pneg %p38
        $region34: #{tpu_custom_call.1} parent=31 // pred_check_branch
          %207 = sbr.rel (%p205) target = $region36
        $region35: #{tpu_custom_call.1} parent=31 // pred_region
          %s208 = sand.u32 %s28, 1
          %s209 = scalar_lea.sflag [#allocation4], %s208
          %s210 = sand.u32 %s28, 1
          %s211 = smul.addr %s210, 16
          %s212 = scalar_lea.vmem [#allocation3], %s211
          %s214 = ssub.s32 256, 256
          %215 = vsyncadd %s209, %s214
          %s216 = smul.addr %s18, 2
          %s217 = smul.addr %s216, 128
          %s218 = scalar_lea.hbm %s0, %s217
          %s219 = sshll.u32 %s212, 4
          %s220 = int_to_ptr.vmem [resolvable:$true] %s219
          %225 = dma.hbm_to_vmem [thread:$0]  %s218, 256, %s220, %s209, 128, 128, 8
        $region36: #{tpu_custom_call.1} parent=31 // pred_fallthru
          _
      $region32: #{tpu_custom_call.1} parent=5 // pred_fallthru
        _
      %p226 = scmp.le.s32.totalorder 1, %s18
      %p227 = scmp.lt.s32.totalorder %s18, 3
      %p228 = pnand %p226, %p227
      %p229 = pneg %p228
      // Predicated region
      $region37: #{tpu_custom_call.1} parent=5 // pred_check
        _
      $region38: #{tpu_custom_call.1} parent=5 // pred_check_branch
        %231 = sbr.rel (%p228) target = $region40
      $region39: #{tpu_custom_call.1} parent=5 // pred_region
        %s232 = ssub.s32 %s18, 1
        %s233 = sand.u32 %s31, 1
        %s234 = scalar_lea.sflag [#allocation4], %s233
        %s235 = sand.u32 %s31, 1
        %s236 = smul.addr %s235, 16
        %s237 = scalar_lea.vmem [#allocation3], %s236
        // Predicated region
        $region41: #{tpu_custom_call.1} parent=39 // pred_check
          %p238 = pneg %p44
        $region42: #{tpu_custom_call.1} parent=39 // pred_check_branch
          %240 = sbr.rel (%p238) target = $region44
        $region43: #{tpu_custom_call.1} parent=39 // pred_region
          %241 = dma.done %s234, 256
        $region44: #{tpu_custom_call.1} parent=39 // pred_fallthru
          _
        // Predicated region
        $region45: #{tpu_custom_call.1} parent=39 // pred_check
          %p242 = pneg %p65
        $region46: #{tpu_custom_call.1} parent=39 // pred_check_branch
          %244 = sbr.rel (%p242) target = $region48
        $region47: #{tpu_custom_call.1} parent=39 // pred_region
          %245 = dma.done [#allocation7], 3072
        $region48: #{tpu_custom_call.1} parent=39 // pred_fallthru
          _
        // Predicated region
        $region49: #{tpu_custom_call.1} parent=39 // pred_check
          %p246 = pneg %p107
        $region50: #{tpu_custom_call.1} parent=39 // pred_check_branch
          %248 = sbr.rel (%p246) target = $region52
        $region51: #{tpu_custom_call.1} parent=39 // pred_region
          %249 = dma.done [#allocation7], 3072
        $region52: #{tpu_custom_call.1} parent=39 // pred_fallthru
          _
        %s250 = sand.u32 %s31, 1
        %s251 = scalar_lea.sflag [#allocation4], %s250
        %s252 = sand.u32 %s31, 1
        %s253 = smul.addr %s252, 16
        %s254 = scalar_lea.vmem [#allocation3], %s253
        %p255 = pneg %p44
        %p256 = pneg %p41
        %p257 = pneg %p65
        %p258 = pneg %p62
        %p259 = pneg %p86
        %p260 = pneg %p83
        %p261 = pneg %p107
        %p262 = pneg %p104
        %p263 = pneg %p128
        %p264 = pneg %p125
        %p265 = pneg %p154
        %p266 = pneg %p151
        %s267 = sand.u32 %s141, 1
        %s268 = scalar_lea.sflag [#allocation5], %s267
        %s269 = sand.u32 %s141, 1
        %s270 = smul.addr %s269, 16
        %s271 = scalar_lea.vmem [#allocation9], %s270
        %v273 = vld [vmem:[%s237] sm:$0xff]
        %v274 = vld [vmem:[%s237 + $0x8] sm:$0xff]
        %v275 = vld [vmem:[%s2] sm:$0x1]
        %v276 = vld [vmem:[%s4] sm:$0x1]
        %v277 = vmax.f32 %v273, 0.0
        %v278 = vmax.f32 %v274, 0.0
        %vm279 = vcmask 1043459
        %vm280 = vsmask.f32 7950
        %vm281 = vmand %vm279, %vm280
        %v282 = vld [vmem:[#allocation2 + $0x4] sm:$0x8]
        %v283 = vsel %vm281, 0, %v282
        %284 = vst [vmem:[#allocation2 + $0x4] sm:$0x8] %v283
        %vm285 = vcmask 1040384
        %vm286 = vsmask.f32 256
        %vm287 = vmand %vm285, %vm286
        %v288 = vld [vmem:[#allocation2 + $0x10] sm:$0x1]
        %v289 = vsel %vm287, 0, %v288
        %290 = vst [vmem:[#allocation2 + $0x10] sm:$0x1] %v289
        %v291 = vpack.c.bf16 %v278, %v277
        %v293 = vunpack.c.l.b16 %v291
        %v294 = vunpack.c.h.b16 %v291
        %v295 = vpack.c.b16 %v293, %v293
        %v296 = vpack.c.b16 %v294, %v294
        %299 = vst [vmem:[#allocation2 + $0x8] sm:$0xf] %v295
        %300 = vst [vmem:[#allocation2 + $0xc] sm:$0xf] %v296
        %v302 = vlaneseq
        %v303 = vshrl.u32 %v302, 7
        %v304 = vsub.s32 0, %v303
        %v305 = vrot.slane %v275, %v304
        %v307 = vld [vmem:[#allocation6] sm:$0xf]
        %v308 = vld [vmem:[#allocation6 + $0x4] sm:$0xf]
        %v309 = vld [vmem:[#allocation6 + $0x8] sm:$0xf]
        %v310 = vld [vmem:[#allocation6 + $0xc] sm:$0xf]
        %v311 = vld [vmem:[#allocation6 + $0x10] sm:$0xf]
        %v312 = vld [vmem:[#allocation6 + $0x14] sm:$0xf]
        %v313 = vld [vmem:[#allocation6 + $0x18] sm:$0xf]
        %v314 = vld [vmem:[#allocation6 + $0x1c] sm:$0xf]
        %v315 = vld [vmem:[#allocation6 + $0x20] sm:$0xf]
        %v316 = vld [vmem:[#allocation6 + $0x24] sm:$0xf]
        %v317 = vld [vmem:[#allocation6 + $0x28] sm:$0xf]
        %v318 = vld [vmem:[#allocation6 + $0x2c] sm:$0xf]
        %v319 = vld [vmem:[#allocation6 + $0x30] sm:$0xf]
        %v320 = vld [vmem:[#allocation6 + $0x34] sm:$0xf]
        %v321 = vld [vmem:[#allocation6 + $0x38] sm:$0xf]
        %v322 = vld [vmem:[#allocation6 + $0x3c] sm:$0xf]
        %v323 = vld [vmem:[#allocation2 + $0x4] sm:$0x8]
        %v324 = vld [vmem:[#allocation2 + $0x8] sm:$0xf]
        %v325 = vld [vmem:[#allocation2 + $0xc] sm:$0xf]
        %v329 = vunpack.c.l.b16 %v323
        %v330 = vunpack.c.l.b16 %v324
        %v331 = vunpack.c.l.b16 %v325
        %v332 = vpack.c.b16 %v330, %v329
        %v333 = vpack.c.b16 %v331, %v331
        %vm334 = vsmask.f32 4352
        %v336 = vshrl.u32 %v332, 16
        %v338 = vrot.slane %v336, 3
        %v339 = vshll.u32 %v332, 16
        %v341 = vrot.slane %v339, 4
        %v342 = vor.u32 %v338, %v341
        %v344 = vshrl.u32 %v333, 16
        %v346 = vrot.slane %v344, 3
        %v347 = vshll.u32 %v333, 16
        %v349 = vrot.slane %v347, 4
        %v350 = vor.u32 %v346, %v349
        %v351 = vsel %vm334, %v342, %v350
        %v369 = vunpack.c.l.b16 %v307
        %v370 = vunpack.c.l.b16 %v308
        %v371 = vunpack.c.l.b16 %v309
        %v372 = vunpack.c.l.b16 %v310
        %v373 = vunpack.c.l.b16 %v311
        %v374 = vunpack.c.l.b16 %v312
        %v375 = vunpack.c.l.b16 %v313
        %v376 = vunpack.c.l.b16 %v314
        %v377 = vunpack.c.l.b16 %v315
        %v378 = vunpack.c.l.b16 %v316
        %v379 = vunpack.c.l.b16 %v317
        %v380 = vunpack.c.l.b16 %v318
        %v381 = vunpack.c.l.b16 %v319
        %v382 = vunpack.c.l.b16 %v320
        %v383 = vunpack.c.l.b16 %v321
        %v384 = vunpack.c.l.b16 %v322
        %v385 = vpack.c.b16 %v370, %v369
        %v386 = vpack.c.b16 %v372, %v371
        %v387 = vpack.c.b16 %v374, %v373
        %v388 = vpack.c.b16 %v376, %v375
        %v389 = vpack.c.b16 %v378, %v377
        %v390 = vpack.c.b16 %v380, %v379
        %v391 = vpack.c.b16 %v382, %v381
        %v392 = vpack.c.b16 %v384, %v383
        %401 = vmatprep.subr.bf16.mxu0 0
        %402 = vmatpush1.bf16.msra.mxu0 %v392
        %403 = vmatprep.subr.bf16.mxu0 0
        %404 = vmatpush1.bf16.msra.mxu0 %v391
        %405 = vmatprep.subr.bf16.mxu0 0
        %406 = vmatpush1.bf16.msra.mxu0 %v390
        %407 = vmatprep.subr.bf16.mxu0 0
        %408 = vmatpush1.bf16.msra.mxu0 %v389
        %409 = vmatprep.subr.bf16.mxu0 0
        %410 = vmatpush1.bf16.msra.mxu0 %v388
        %411 = vmatprep.subr.bf16.mxu0 0
        %412 = vmatpush1.bf16.msra.mxu0 %v387
        %413 = vmatprep.subr.bf16.mxu0 0
        %414 = vmatpush1.bf16.msra.mxu0 %v386
        %415 = vmatprep.subr.bf16.mxu0 0
        %416 = vmatpush1.bf16.msra.mxu0 %v385
        %417 = vmatprep.subr.bf16.mxu0 0
        %418 = vmatpush2.bf16.msra.mxu0 0
        %419 = vmatprep.subr.bf16.mxu0 0
        %420 = vmatpush2.bf16.msra.mxu0 0
        %421 = vmatprep.subr.bf16.mxu0 0
        %422 = vmatpush2.bf16.msra.mxu0 0
        %423 = vmatprep.subr.bf16.mxu0 0
        %424 = vmatpush2.bf16.msra.mxu0 0
        %425 = vmatprep.subr.bf16.mxu0 0
        %426 = vmatpush2.bf16.msra.mxu0 0
        %427 = vmatprep.subr.bf16.mxu0 0
        %428 = vmatpush2.bf16.msra.mxu0 0
        %429 = vmatprep.subr.bf16.mxu0 0
        %430 = vmatpush2.bf16.msra.mxu0 0
        %431 = vmatprep.subr.bf16.mxu0 0
        %432 = vmatpush2.bf16.msra.mxu0 0
        %433 = vmatprep.mubr.bf16.mxu0 0
        %434 = vmatmul.mubr.bf16.gmra.mxu0 %v351
        %v435 = vpop.f32.mrf.mxu0
        %v436 = vadd.f32 0.0, %v435
        %v437 = vpop.f32.mrf.mxu0
        %v438 = vpop.f32.mrf.mxu0
        %v439 = vadd.f32 0.0, %v438
        %v440 = vpop.f32.mrf.mxu0
        %441 = vdwg.mxu0
        %v442 = vadd.f32 %v305, %v436
        %v443 = vadd.f32 %v305, %v439
        %v444 = vld [vmem:[#allocation6 + $0x40] sm:$0xf]
        %v445 = vld [vmem:[#allocation6 + $0x44] sm:$0xf]
        %v446 = vld [vmem:[#allocation6 + $0x48] sm:$0xf]
        %v447 = vld [vmem:[#allocation6 + $0x4c] sm:$0xf]
        %v448 = vld [vmem:[#allocation6 + $0x50] sm:$0xf]
        %v449 = vld [vmem:[#allocation6 + $0x54] sm:$0xf]
        %v450 = vld [vmem:[#allocation6 + $0x58] sm:$0xf]
        %v451 = vld [vmem:[#allocation6 + $0x5c] sm:$0xf]
        %v452 = vld [vmem:[#allocation6 + $0x60] sm:$0xf]
        %v453 = vld [vmem:[#allocation6 + $0x64] sm:$0xf]
        %v454 = vld [vmem:[#allocation6 + $0x68] sm:$0xf]
        %v455 = vld [vmem:[#allocation6 + $0x6c] sm:$0xf]
        %v456 = vld [vmem:[#allocation6 + $0x70] sm:$0xf]
        %v457 = vld [vmem:[#allocation6 + $0x74] sm:$0xf]
        %v458 = vld [vmem:[#allocation6 + $0x78] sm:$0xf]
        %v459 = vld [vmem:[#allocation6 + $0x7c] sm:$0xf]
        %v460 = vpack.c.b16 %v331, %v330
        %v478 = vunpack.c.l.b16 %v444
        %v479 = vunpack.c.l.b16 %v445
        %v480 = vunpack.c.l.b16 %v446
        %v481 = vunpack.c.l.b16 %v447
        %v482 = vunpack.c.l.b16 %v448
        %v483 = vunpack.c.l.b16 %v449
        %v484 = vunpack.c.l.b16 %v450
        %v485 = vunpack.c.l.b16 %v451
        %v486 = vunpack.c.l.b16 %v452
        %v487 = vunpack.c.l.b16 %v453
        %v488 = vunpack.c.l.b16 %v454
        %v489 = vunpack.c.l.b16 %v455
        %v490 = vunpack.c.l.b16 %v456
        %v491 = vunpack.c.l.b16 %v457
        %v492 = vunpack.c.l.b16 %v458
        %v493 = vunpack.c.l.b16 %v459
        %v494 = vpack.c.b16 %v479, %v478
        %v495 = vpack.c.b16 %v481, %v480
        %v496 = vpack.c.b16 %v483, %v482
        %v497 = vpack.c.b16 %v485, %v484
        %v498 = vpack.c.b16 %v487, %v486
        %v499 = vpack.c.b16 %v489, %v488
        %v500 = vpack.c.b16 %v491, %v490
        %v501 = vpack.c.b16 %v493, %v492
        %510 = vmatprep.subr.bf16.mxu0 0
        %511 = vmatpush1.bf16.msra.mxu0 %v501
        %512 = vmatprep.subr.bf16.mxu0 0
        %513 = vmatpush1.bf16.msra.mxu0 %v500
        %514 = vmatprep.subr.bf16.mxu0 0
        %515 = vmatpush1.bf16.msra.mxu0 %v499
        %516 = vmatprep.subr.bf16.mxu0 0
        %517 = vmatpush1.bf16.msra.mxu0 %v498
        %518 = vmatprep.subr.bf16.mxu0 0
        %519 = vmatpush1.bf16.msra.mxu0 %v497
        %520 = vmatprep.subr.bf16.mxu0 0
        %521 = vmatpush1.bf16.msra.mxu0 %v496
        %522 = vmatprep.subr.bf16.mxu0 0
        %523 = vmatpush1.bf16.msra.mxu0 %v495
        %524 = vmatprep.subr.bf16.mxu0 0
        %525 = vmatpush1.bf16.msra.mxu0 %v494
        %526 = vmatprep.subr.bf16.mxu0 0
        %527 = vmatpush2.bf16.msra.mxu0 0
        %528 = vmatprep.subr.bf16.mxu0 0
        %529 = vmatpush2.bf16.msra.mxu0 0
        %530 = vmatprep.subr.bf16.mxu0 0
        %531 = vmatpush2.bf16.msra.mxu0 0
        %532 = vmatprep.subr.bf16.mxu0 0
        %533 = vmatpush2.bf16.msra.mxu0 0
        %534 = vmatprep.subr.bf16.mxu0 0
        %535 = vmatpush2.bf16.msra.mxu0 0
        %536 = vmatprep.subr.bf16.mxu0 0
        %537 = vmatpush2.bf16.msra.mxu0 0
        %538 = vmatprep.subr.bf16.mxu0 0
        %539 = vmatpush2.bf16.msra.mxu0 0
        %540 = vmatprep.subr.bf16.mxu0 0
        %541 = vmatpush2.bf16.msra.mxu0 0
        %542 = vmatprep.mubr.bf16.mxu0 0
        %543 = vmatmul.mubr.bf16.gmra.mxu0 %v460
        %v544 = vpop.f32.mrf.mxu0
        %v545 = vadd.f32 0.0, %v544
        %v546 = vpop.f32.mrf.mxu0
        %v547 = vpop.f32.mrf.mxu0
        %v548 = vadd.f32 0.0, %v547
        %v549 = vpop.f32.mrf.mxu0
        %550 = vdwg.mxu0
        %v551 = vadd.f32 %v442, %v545
        %v552 = vadd.f32 %v443, %v548
        %v553 = vld [vmem:[#allocation6 + $0x80] sm:$0xf]
        %v554 = vld [vmem:[#allocation6 + $0x84] sm:$0xf]
        %v555 = vld [vmem:[#allocation6 + $0x88] sm:$0xf]
        %v556 = vld [vmem:[#allocation6 + $0x8c] sm:$0xf]
        %v557 = vld [vmem:[#allocation6 + $0x90] sm:$0xf]
        %v558 = vld [vmem:[#allocation6 + $0x94] sm:$0xf]
        %v559 = vld [vmem:[#allocation6 + $0x98] sm:$0xf]
        %v560 = vld [vmem:[#allocation6 + $0x9c] sm:$0xf]
        %v561 = vld [vmem:[#allocation6 + $0xa0] sm:$0xf]
        %v562 = vld [vmem:[#allocation6 + $0xa4] sm:$0xf]
        %v563 = vld [vmem:[#allocation6 + $0xa8] sm:$0xf]
        %v564 = vld [vmem:[#allocation6 + $0xac] sm:$0xf]
        %v565 = vld [vmem:[#allocation6 + $0xb0] sm:$0xf]
        %v566 = vld [vmem:[#allocation6 + $0xb4] sm:$0xf]
        %v567 = vld [vmem:[#allocation6 + $0xb8] sm:$0xf]
        %v568 = vld [vmem:[#allocation6 + $0xbc] sm:$0xf]
        %v569 = vld [vmem:[#allocation2 + $0x8] sm:$0xf]
        %v570 = vld [vmem:[#allocation2 + $0xc] sm:$0xf]
        %v571 = vld [vmem:[#allocation2 + $0x10] sm:$0x1]
        %v575 = vunpack.c.l.b16 %v569
        %v576 = vunpack.c.l.b16 %v570
        %v577 = vunpack.c.l.b16 %v571
        %v578 = vpack.c.b16 %v576, %v575
        %v579 = vpack.c.b16 %v577, %v577
        %vm580 = vsmask.f32 7424
        %v582 = vshrl.u32 %v578, 16
        %v584 = vshll.u32 %v578, 16
        %v586 = vrot.slane %v584, 1
        %v587 = vor.u32 %v582, %v586
        %v589 = vshll.u32 %v579, 16
        %v591 = vrot.slane %v589, 1
        %v592 = vsel %vm580, %v587, %v591
        %v610 = vunpack.c.l.b16 %v553
        %v611 = vunpack.c.l.b16 %v554
        %v612 = vunpack.c.l.b16 %v555
        %v613 = vunpack.c.l.b16 %v556
        %v614 = vunpack.c.l.b16 %v557
        %v615 = vunpack.c.l.b16 %v558
        %v616 = vunpack.c.l.b16 %v559
        %v617 = vunpack.c.l.b16 %v560
        %v618 = vunpack.c.l.b16 %v561
        %v619 = vunpack.c.l.b16 %v562
        %v620 = vunpack.c.l.b16 %v563
        %v621 = vunpack.c.l.b16 %v564
        %v622 = vunpack.c.l.b16 %v565
        %v623 = vunpack.c.l.b16 %v566
        %v624 = vunpack.c.l.b16 %v567
        %v625 = vunpack.c.l.b16 %v568
        %v626 = vpack.c.b16 %v611, %v610
        %v627 = vpack.c.b16 %v613, %v612
        %v628 = vpack.c.b16 %v615, %v614
        %v629 = vpack.c.b16 %v617, %v616
        %v630 = vpack.c.b16 %v619, %v618
        %v631 = vpack.c.b16 %v621, %v620
        %v632 = vpack.c.b16 %v623, %v622
        %v633 = vpack.c.b16 %v625, %v624
        %642 = vmatprep.subr.bf16.mxu0 0
        %643 = vmatpush1.bf16.msra.mxu0 %v633
        %644 = vmatprep.subr.bf16.mxu0 0
        %645 = vmatpush1.bf16.msra.mxu0 %v632
        %646 = vmatprep.subr.bf16.mxu0 0
        %647 = vmatpush1.bf16.msra.mxu0 %v631
        %648 = vmatprep.subr.bf16.mxu0 0
        %649 = vmatpush1.bf16.msra.mxu0 %v630
        %650 = vmatprep.subr.bf16.mxu0 0
        %651 = vmatpush1.bf16.msra.mxu0 %v629
        %652 = vmatprep.subr.bf16.mxu0 0
        %653 = vmatpush1.bf16.msra.mxu0 %v628
        %654 = vmatprep.subr.bf16.mxu0 0
        %655 = vmatpush1.bf16.msra.mxu0 %v627
        %656 = vmatprep.subr.bf16.mxu0 0
        %657 = vmatpush1.bf16.msra.mxu0 %v626
        %658 = vmatprep.subr.bf16.mxu0 0
        %659 = vmatpush2.bf16.msra.mxu0 0
        %660 = vmatprep.subr.bf16.mxu0 0
        %661 = vmatpush2.bf16.msra.mxu0 0
        %662 = vmatprep.subr.bf16.mxu0 0
        %663 = vmatpush2.bf16.msra.mxu0 0
        %664 = vmatprep.subr.bf16.mxu0 0
        %665 = vmatpush2.bf16.msra.mxu0 0
        %666 = vmatprep.subr.bf16.mxu0 0
        %667 = vmatpush2.bf16.msra.mxu0 0
        %668 = vmatprep.subr.bf16.mxu0 0
        %669 = vmatpush2.bf16.msra.mxu0 0
        %670 = vmatprep.subr.bf16.mxu0 0
        %671 = vmatpush2.bf16.msra.mxu0 0
        %672 = vmatprep.subr.bf16.mxu0 0
        %673 = vmatpush2.bf16.msra.mxu0 0
        %674 = vmatprep.mubr.bf16.mxu0 0
        %675 = vmatmul.mubr.bf16.gmra.mxu0 %v592
        %v676 = vpop.f32.mrf.mxu0
        %v677 = vadd.f32 0.0, %v676
        %v678 = vpop.f32.mrf.mxu0
        %v679 = vpop.f32.mrf.mxu0
        %v680 = vadd.f32 0.0, %v679
        %v681 = vpop.f32.mrf.mxu0
        %682 = vdwg.mxu0
        %v683 = vadd.f32 %v551, %v677
        %v684 = vadd.f32 %v552, %v680
        %v685 = vmax.f32 %v683, 0.0
        %v686 = vmax.f32 %v684, 0.0
        %v687 = vpack.c.bf16 %v686, %v685
        %v689 = vunpack.c.l.b16 %v687
        %v690 = vunpack.c.h.b16 %v687
        %v691 = vpack.c.b16 %v689, %v689
        %v692 = vpack.c.b16 %v690, %v690
        %695 = vst [vmem:[#allocation2 + $0x8] sm:$0xf] %v691
        %696 = vst [vmem:[#allocation2 + $0xc] sm:$0xf] %v692
        %v698 = vlaneseq
        %v699 = vshrl.u32 %v698, 7
        %v700 = vsub.s32 0, %v699
        %v701 = vrot.slane %v276, %v700
        %v703 = vld [vmem:[#allocation8] sm:$0xf]
        %v704 = vld [vmem:[#allocation8 + $0x4] sm:$0xf]
        %v705 = vld [vmem:[#allocation8 + $0x8] sm:$0xf]
        %v706 = vld [vmem:[#allocation8 + $0xc] sm:$0xf]
        %v707 = vld [vmem:[#allocation8 + $0x10] sm:$0xf]
        %v708 = vld [vmem:[#allocation8 + $0x14] sm:$0xf]
        %v709 = vld [vmem:[#allocation8 + $0x18] sm:$0xf]
        %v710 = vld [vmem:[#allocation8 + $0x1c] sm:$0xf]
        %v711 = vld [vmem:[#allocation8 + $0x20] sm:$0xf]
        %v712 = vld [vmem:[#allocation8 + $0x24] sm:$0xf]
        %v713 = vld [vmem:[#allocation8 + $0x28] sm:$0xf]
        %v714 = vld [vmem:[#allocation8 + $0x2c] sm:$0xf]
        %v715 = vld [vmem:[#allocation8 + $0x30] sm:$0xf]
        %v716 = vld [vmem:[#allocation8 + $0x34] sm:$0xf]
        %v717 = vld [vmem:[#allocation8 + $0x38] sm:$0xf]
        %v718 = vld [vmem:[#allocation8 + $0x3c] sm:$0xf]
        %v719 = vld [vmem:[#allocation2 + $0x4] sm:$0x8]
        %v720 = vld [vmem:[#allocation2 + $0x8] sm:$0xf]
        %v721 = vld [vmem:[#allocation2 + $0xc] sm:$0xf]
        %v725 = vunpack.c.l.b16 %v719
        %v726 = vunpack.c.l.b16 %v720
        %v727 = vunpack.c.l.b16 %v721
        %v728 = vpack.c.b16 %v726, %v725
        %v729 = vpack.c.b16 %v727, %v727
        %v731 = vshrl.u32 %v728, 16
        %v733 = vrot.slane %v731, 3
        %v734 = vshll.u32 %v728, 16
        %v736 = vrot.slane %v734, 4
        %v737 = vor.u32 %v733, %v736
        %v739 = vshrl.u32 %v729, 16
        %v741 = vrot.slane %v739, 3
        %v742 = vshll.u32 %v729, 16
        %v744 = vrot.slane %v742, 4
        %v745 = vor.u32 %v741, %v744
        %v746 = vsel %vm334, %v737, %v745
        %v764 = vunpack.c.l.b16 %v703
        %v765 = vunpack.c.l.b16 %v704
        %v766 = vunpack.c.l.b16 %v705
        %v767 = vunpack.c.l.b16 %v706
        %v768 = vunpack.c.l.b16 %v707
        %v769 = vunpack.c.l.b16 %v708
        %v770 = vunpack.c.l.b16 %v709
        %v771 = vunpack.c.l.b16 %v710
        %v772 = vunpack.c.l.b16 %v711
        %v773 = vunpack.c.l.b16 %v712
        %v774 = vunpack.c.l.b16 %v713
        %v775 = vunpack.c.l.b16 %v714
        %v776 = vunpack.c.l.b16 %v715
        %v777 = vunpack.c.l.b16 %v716
        %v778 = vunpack.c.l.b16 %v717
        %v779 = vunpack.c.l.b16 %v718
        %v780 = vpack.c.b16 %v765, %v764
        %v781 = vpack.c.b16 %v767, %v766
        %v782 = vpack.c.b16 %v769, %v768
        %v783 = vpack.c.b16 %v771, %v770
        %v784 = vpack.c.b16 %v773, %v772
        %v785 = vpack.c.b16 %v775, %v774
        %v786 = vpack.c.b16 %v777, %v776
        %v787 = vpack.c.b16 %v779, %v778
        %796 = vmatprep.subr.bf16.mxu0 0
        %797 = vmatpush1.bf16.msra.mxu0 %v787
        %798 = vmatprep.subr.bf16.mxu0 0
        %799 = vmatpush1.bf16.msra.mxu0 %v786
        %800 = vmatprep.subr.bf16.mxu0 0
        %801 = vmatpush1.bf16.msra.mxu0 %v785
        %802 = vmatprep.subr.bf16.mxu0 0
        %803 = vmatpush1.bf16.msra.mxu0 %v784
        %804 = vmatprep.subr.bf16.mxu0 0
        %805 = vmatpush1.bf16.msra.mxu0 %v783
        %806 = vmatprep.subr.bf16.mxu0 0
        %807 = vmatpush1.bf16.msra.mxu0 %v782
        %808 = vmatprep.subr.bf16.mxu0 0
        %809 = vmatpush1.bf16.msra.mxu0 %v781
        %810 = vmatprep.subr.bf16.mxu0 0
        %811 = vmatpush1.bf16.msra.mxu0 %v780
        %812 = vmatprep.subr.bf16.mxu0 0
        %813 = vmatpush2.bf16.msra.mxu0 0
        %814 = vmatprep.subr.bf16.mxu0 0
        %815 = vmatpush2.bf16.msra.mxu0 0
        %816 = vmatprep.subr.bf16.mxu0 0
        %817 = vmatpush2.bf16.msra.mxu0 0
        %818 = vmatprep.subr.bf16.mxu0 0
        %819 = vmatpush2.bf16.msra.mxu0 0
        %820 = vmatprep.subr.bf16.mxu0 0
        %821 = vmatpush2.bf16.msra.mxu0 0
        %822 = vmatprep.subr.bf16.mxu0 0
        %823 = vmatpush2.bf16.msra.mxu0 0
        %824 = vmatprep.subr.bf16.mxu0 0
        %825 = vmatpush2.bf16.msra.mxu0 0
        %826 = vmatprep.subr.bf16.mxu0 0
        %827 = vmatpush2.bf16.msra.mxu0 0
        %828 = vmatprep.mubr.bf16.mxu0 0
        %829 = vmatmul.mubr.bf16.gmra.mxu0 %v746
        %v830 = vpop.f32.mrf.mxu0
        %v831 = vadd.f32 0.0, %v830
        %v832 = vpop.f32.mrf.mxu0
        %v833 = vpop.f32.mrf.mxu0
        %v834 = vadd.f32 0.0, %v833
        %v835 = vpop.f32.mrf.mxu0
        %836 = vdwg.mxu0
        %v837 = vadd.f32 %v701, %v831
        %v838 = vadd.f32 %v701, %v834
        %v839 = vld [vmem:[#allocation8 + $0x40] sm:$0xf]
        %v840 = vld [vmem:[#allocation8 + $0x44] sm:$0xf]
        %v841 = vld [vmem:[#allocation8 + $0x48] sm:$0xf]
        %v842 = vld [vmem:[#allocation8 + $0x4c] sm:$0xf]
        %v843 = vld [vmem:[#allocation8 + $0x50] sm:$0xf]
        %v844 = vld [vmem:[#allocation8 + $0x54] sm:$0xf]
        %v845 = vld [vmem:[#allocation8 + $0x58] sm:$0xf]
        %v846 = vld [vmem:[#allocation8 + $0x5c] sm:$0xf]
        %v847 = vld [vmem:[#allocation8 + $0x60] sm:$0xf]
        %v848 = vld [vmem:[#allocation8 + $0x64] sm:$0xf]
        %v849 = vld [vmem:[#allocation8 + $0x68] sm:$0xf]
        %v850 = vld [vmem:[#allocation8 + $0x6c] sm:$0xf]
        %v851 = vld [vmem:[#allocation8 + $0x70] sm:$0xf]
        %v852 = vld [vmem:[#allocation8 + $0x74] sm:$0xf]
        %v853 = vld [vmem:[#allocation8 + $0x78] sm:$0xf]
        %v854 = vld [vmem:[#allocation8 + $0x7c] sm:$0xf]
        %v855 = vpack.c.b16 %v727, %v726
        %v873 = vunpack.c.l.b16 %v839
        %v874 = vunpack.c.l.b16 %v840
        %v875 = vunpack.c.l.b16 %v841
        %v876 = vunpack.c.l.b16 %v842
        %v877 = vunpack.c.l.b16 %v843
        %v878 = vunpack.c.l.b16 %v844
        %v879 = vunpack.c.l.b16 %v845
        %v880 = vunpack.c.l.b16 %v846
        %v881 = vunpack.c.l.b16 %v847
        %v882 = vunpack.c.l.b16 %v848
        %v883 = vunpack.c.l.b16 %v849
        %v884 = vunpack.c.l.b16 %v850
        %v885 = vunpack.c.l.b16 %v851
        %v886 = vunpack.c.l.b16 %v852
        %v887 = vunpack.c.l.b16 %v853
        %v888 = vunpack.c.l.b16 %v854
        %v889 = vpack.c.b16 %v874, %v873
        %v890 = vpack.c.b16 %v876, %v875
        %v891 = vpack.c.b16 %v878, %v877
        %v892 = vpack.c.b16 %v880, %v879
        %v893 = vpack.c.b16 %v882, %v881
        %v894 = vpack.c.b16 %v884, %v883
        %v895 = vpack.c.b16 %v886, %v885
        %v896 = vpack.c.b16 %v888, %v887
        %905 = vmatprep.subr.bf16.mxu0 0
        %906 = vmatpush1.bf16.msra.mxu0 %v896
        %907 = vmatprep.subr.bf16.mxu0 0
        %908 = vmatpush1.bf16.msra.mxu0 %v895
        %909 = vmatprep.subr.bf16.mxu0 0
        %910 = vmatpush1.bf16.msra.mxu0 %v894
        %911 = vmatprep.subr.bf16.mxu0 0
        %912 = vmatpush1.bf16.msra.mxu0 %v893
        %913 = vmatprep.subr.bf16.mxu0 0
        %914 = vmatpush1.bf16.msra.mxu0 %v892
        %915 = vmatprep.subr.bf16.mxu0 0
        %916 = vmatpush1.bf16.msra.mxu0 %v891
        %917 = vmatprep.subr.bf16.mxu0 0
        %918 = vmatpush1.bf16.msra.mxu0 %v890
        %919 = vmatprep.subr.bf16.mxu0 0
        %920 = vmatpush1.bf16.msra.mxu0 %v889
        %921 = vmatprep.subr.bf16.mxu0 0
        %922 = vmatpush2.bf16.msra.mxu0 0
        %923 = vmatprep.subr.bf16.mxu0 0
        %924 = vmatpush2.bf16.msra.mxu0 0
        %925 = vmatprep.subr.bf16.mxu0 0
        %926 = vmatpush2.bf16.msra.mxu0 0
        %927 = vmatprep.subr.bf16.mxu0 0
        %928 = vmatpush2.bf16.msra.mxu0 0
        %929 = vmatprep.subr.bf16.mxu0 0
        %930 = vmatpush2.bf16.msra.mxu0 0
        %931 = vmatprep.subr.bf16.mxu0 0
        %932 = vmatpush2.bf16.msra.mxu0 0
        %933 = vmatprep.subr.bf16.mxu0 0
        %934 = vmatpush2.bf16.msra.mxu0 0
        %935 = vmatprep.subr.bf16.mxu0 0
        %936 = vmatpush2.bf16.msra.mxu0 0
        %937 = vmatprep.mubr.bf16.mxu0 0
        %938 = vmatmul.mubr.bf16.gmra.mxu0 %v855
        %v939 = vpop.f32.mrf.mxu0
        %v940 = vadd.f32 0.0, %v939
        %v941 = vpop.f32.mrf.mxu0
        %v942 = vpop.f32.mrf.mxu0
        %v943 = vadd.f32 0.0, %v942
        %v944 = vpop.f32.mrf.mxu0
        %945 = vdwg.mxu0
        %v946 = vadd.f32 %v837, %v940
        %v947 = vadd.f32 %v838, %v943
        %v948 = vld [vmem:[#allocation8 + $0x80] sm:$0xf]
        %v949 = vld [vmem:[#allocation8 + $0x84] sm:$0xf]
        %v950 = vld [vmem:[#allocation8 + $0x88] sm:$0xf]
        %v951 = vld [vmem:[#allocation8 + $0x8c] sm:$0xf]
        %v952 = vld [vmem:[#allocation8 + $0x90] sm:$0xf]
        %v953 = vld [vmem:[#allocation8 + $0x94] sm:$0xf]
        %v954 = vld [vmem:[#allocation8 + $0x98] sm:$0xf]
        %v955 = vld [vmem:[#allocation8 + $0x9c] sm:$0xf]
        %v956 = vld [vmem:[#allocation8 + $0xa0] sm:$0xf]
        %v957 = vld [vmem:[#allocation8 + $0xa4] sm:$0xf]
        %v958 = vld [vmem:[#allocation8 + $0xa8] sm:$0xf]
        %v959 = vld [vmem:[#allocation8 + $0xac] sm:$0xf]
        %v960 = vld [vmem:[#allocation8 + $0xb0] sm:$0xf]
        %v961 = vld [vmem:[#allocation8 + $0xb4] sm:$0xf]
        %v962 = vld [vmem:[#allocation8 + $0xb8] sm:$0xf]
        %v963 = vld [vmem:[#allocation8 + $0xbc] sm:$0xf]
        %v964 = vld [vmem:[#allocation2 + $0x8] sm:$0xf]
        %v965 = vld [vmem:[#allocation2 + $0xc] sm:$0xf]
        %v966 = vld [vmem:[#allocation2 + $0x10] sm:$0x1]
        %v970 = vunpack.c.l.b16 %v964
        %v971 = vunpack.c.l.b16 %v965
        %v972 = vunpack.c.l.b16 %v966
        %v973 = vpack.c.b16 %v971, %v970
        %v974 = vpack.c.b16 %v972, %v972
        %v976 = vshrl.u32 %v973, 16
        %v978 = vshll.u32 %v973, 16
        %v980 = vrot.slane %v978, 1
        %v981 = vor.u32 %v976, %v980
        %v983 = vshll.u32 %v974, 16
        %v985 = vrot.slane %v983, 1
        %v986 = vsel %vm580, %v981, %v985
        %v1004 = vunpack.c.l.b16 %v948
        %v1005 = vunpack.c.l.b16 %v949
        %v1006 = vunpack.c.l.b16 %v950
        %v1007 = vunpack.c.l.b16 %v951
        %v1008 = vunpack.c.l.b16 %v952
        %v1009 = vunpack.c.l.b16 %v953
        %v1010 = vunpack.c.l.b16 %v954
        %v1011 = vunpack.c.l.b16 %v955
        %v1012 = vunpack.c.l.b16 %v956
        %v1013 = vunpack.c.l.b16 %v957
        %v1014 = vunpack.c.l.b16 %v958
        %v1015 = vunpack.c.l.b16 %v959
        %v1016 = vunpack.c.l.b16 %v960
        %v1017 = vunpack.c.l.b16 %v961
        %v1018 = vunpack.c.l.b16 %v962
        %v1019 = vunpack.c.l.b16 %v963
        %v1020 = vpack.c.b16 %v1005, %v1004
        %v1021 = vpack.c.b16 %v1007, %v1006
        %v1022 = vpack.c.b16 %v1009, %v1008
        %v1023 = vpack.c.b16 %v1011, %v1010
        %v1024 = vpack.c.b16 %v1013, %v1012
        %v1025 = vpack.c.b16 %v1015, %v1014
        %v1026 = vpack.c.b16 %v1017, %v1016
        %v1027 = vpack.c.b16 %v1019, %v1018
        %1036 = vmatprep.subr.bf16.mxu0 0
        %1037 = vmatpush1.bf16.msra.mxu0 %v1027
        %1038 = vmatprep.subr.bf16.mxu0 0
        %1039 = vmatpush1.bf16.msra.mxu0 %v1026
        %1040 = vmatprep.subr.bf16.mxu0 0
        %1041 = vmatpush1.bf16.msra.mxu0 %v1025
        %1042 = vmatprep.subr.bf16.mxu0 0
        %1043 = vmatpush1.bf16.msra.mxu0 %v1024
        %1044 = vmatprep.subr.bf16.mxu0 0
        %1045 = vmatpush1.bf16.msra.mxu0 %v1023
        %1046 = vmatprep.subr.bf16.mxu0 0
        %1047 = vmatpush1.bf16.msra.mxu0 %v1022
        %1048 = vmatprep.subr.bf16.mxu0 0
        %1049 = vmatpush1.bf16.msra.mxu0 %v1021
        %1050 = vmatprep.subr.bf16.mxu0 0
        %1051 = vmatpush1.bf16.msra.mxu0 %v1020
        %1052 = vmatprep.subr.bf16.mxu0 0
        %1053 = vmatpush2.bf16.msra.mxu0 0
        %1054 = vmatprep.subr.bf16.mxu0 0
        %1055 = vmatpush2.bf16.msra.mxu0 0
        %1056 = vmatprep.subr.bf16.mxu0 0
        %1057 = vmatpush2.bf16.msra.mxu0 0
        %1058 = vmatprep.subr.bf16.mxu0 0
        %1059 = vmatpush2.bf16.msra.mxu0 0
        %1060 = vmatprep.subr.bf16.mxu0 0
        %1061 = vmatpush2.bf16.msra.mxu0 0
        %1062 = vmatprep.subr.bf16.mxu0 0
        %1063 = vmatpush2.bf16.msra.mxu0 0
        %1064 = vmatprep.subr.bf16.mxu0 0
        %1065 = vmatpush2.bf16.msra.mxu0 0
        %1066 = vmatprep.subr.bf16.mxu0 0
        %1067 = vmatpush2.bf16.msra.mxu0 0
        %1068 = vmatprep.mubr.bf16.mxu0 0
        %1069 = vmatmul.mubr.bf16.gmra.mxu0 %v986
        %v1070 = vpop.f32.mrf.mxu0
        %v1071 = vadd.f32 0.0, %v1070
        %v1072 = vpop.f32.mrf.mxu0
        %v1073 = vpop.f32.mrf.mxu0
        %v1074 = vadd.f32 0.0, %v1073
        %v1075 = vpop.f32.mrf.mxu0
        %1076 = vdwg.mxu0
        %v1077 = vadd.f32 %v946, %v1071
        %v1078 = vadd.f32 %v947, %v1074
        %v1079 = vadd.f32 %v1077, %v273
        %v1080 = vadd.f32 %v1078, %v274
        %1081 = vst [vmem:[%s271] sm:$0xff] %v1079
        %1082 = vst [vmem:[%s271 + $0x8] sm:$0xff] %v1080
        %s1083 = sand.u32 %s141, 1
        %s1084 = scalar_lea.sflag [#allocation5], %s1083
        %s1085 = sand.u32 %s141, 1
        %s1086 = smul.addr %s1085, 16
        %s1087 = scalar_lea.vmem [#allocation9], %s1086
        // Predicated region
        $region53: #{tpu_custom_call.1} parent=39 // pred_check
          %p1088 = pneg %p151
        $region54: #{tpu_custom_call.1} parent=39 // pred_check_branch
          %1090 = sbr.rel (%p1088) target = $region56
        $region55: #{tpu_custom_call.1} parent=39 // pred_region
          %s1092 = ssub.s32 256, 256
          %1093 = vsyncadd %s1084, %s1092
          %s1094 = smul.addr %s23, 2
          %s1095 = smul.addr %s1094, 128
          %s1096 = scalar_lea.hbm %s5, %s1095
          %s1097 = sshll.u32 %s1087, 4
          %s1098 = int_to_ptr.vmem [resolvable:$true] %s1097
          %1103 = dma.vmem_to_hbm [thread:$0]  %s1098, 256, %s1096, %s1084, 128, 128, 8
        $region56: #{tpu_custom_call.1} parent=39 // pred_fallthru
          _
      $region40: #{tpu_custom_call.1} parent=5 // pred_fallthru
        _
      %p1104 = scmp.le.s32.totalorder 2, %s18
      // Predicated region
      $region57: #{tpu_custom_call.1} parent=5 // pred_check
        %p1105 = pneg %p1104
      $region58: #{tpu_custom_call.1} parent=5 // pred_check_branch
        %1107 = sbr.rel (%p1105) target = $region60
      $region59: #{tpu_custom_call.1} parent=5 // pred_region
        %s1108 = ssub.s32 %s18, 2
        // Predicated region
        $region61: #{tpu_custom_call.1} parent=59 // pred_check
          %p1109 = pneg %p157
        $region62: #{tpu_custom_call.1} parent=59 // pred_check_branch
          %1111 = sbr.rel (%p1109) target = $region64
        $region63: #{tpu_custom_call.1} parent=59 // pred_region
          %s1112 = sand.u32 %s142, 1
          %s1113 = scalar_lea.sflag [#allocation5], %s1112
          %s1114 = sand.u32 %s142, 1
          %s1115 = smul.addr %s1114, 16
          %s1116 = scalar_lea.vmem [#allocation9], %s1115
          %1117 = dma.done %s1113, 256
        $region64: #{tpu_custom_call.1} parent=59 // pred_fallthru
          _
      $region60: #{tpu_custom_call.1} parent=5 // pred_fallthru
        _
    $region6: #{tpu_custom_call.1} parent=1 // loop_footer
      %s22 = sadd.s32 1, %s18
    $region7: #{tpu_custom_call.1} parent=1 // loop_footer_branch
      %17 = sbr.rel target = $region3
    $region8: #{tpu_custom_call.1} parent=1 // loop_exit
      _
    %1118 = vsyncpa [#allocation4], 1
    %s1119 = scalar_lea.sflag [#allocation4], 1
    %1120 = vsyncpa %s1119, 1
    %1121 = vsyncpa [#allocation7], 1
    %1122 = vsyncpa [#allocation5], 1
    %s1123 = scalar_lea.sflag [#allocation5], 1
    %1124 = vsyncpa %s1123, 1

</llo_original>
